<compile_context>
chip_gen: v5e
topology: v5e:2x2
jax: 0.10.0
libtpu: 0.0.40
codegen_flags: <defaults>
</compile_context>

<pallas_src>
import functools
import math

import jax
import jax.numpy as jnp
from jax.experimental import pallas as pl
from jax.experimental.pallas import tpu as pltpu


# ---------------------------------------------------------------------------
# helpers used inside the kernel (exp / mul / add / rsqrt / where -> VPU/EUP only)
# ---------------------------------------------------------------------------
def _erf(x):
    # Abramowitz & Stegun 7.1.26 rational approximation of erf (max abs err ~1.5e-7).
    a1, a2, a3, a4, a5 = 0.254829592, -0.284496736, 1.421413741, -1.453152027, 1.061405429
    p = 0.3275911
    ax = jnp.abs(x)
    t = 1.0 / (1.0 + p * ax)
    poly = ((((a5 * t + a4) * t + a3) * t + a2) * t + a1) * t
    y = 1.0 - poly * jnp.exp(-ax * ax)
    return jnp.where(x >= 0.0, y, -y)


def _gelu_exact(x):
    # PyTorch nn.GELU() default (erf-based, not the tanh approximation)
    return 0.5 * x * (1.0 + _erf(x * 0.7071067811865476))


def _layer_norm(x, w, b, eps=1e-6):
    # x: (L, D), w/b: (1, D); PyTorch LayerNorm (biased variance, eps inside sqrt, eps=1e-6).
    mu = jnp.mean(x, axis=-1, keepdims=True)
    xc = x - mu
    var = jnp.mean(xc * xc, axis=-1, keepdims=True)
    return xc * jax.lax.rsqrt(var + eps) * w + b


def _layer_norm_noaffine(x, eps=1e-6):
    # normalization only; the affine (w, b) has been folded into the downstream weight/bias.
    mu = jnp.mean(x, axis=-1, keepdims=True)
    xc = x - mu
    var = jnp.mean(xc * xc, axis=-1, keepdims=True)
    return xc * jax.lax.rsqrt(var + eps)


# ---------------------------------------------------------------------------
# the Pallas kernel: one grid step == one batch element
# ---------------------------------------------------------------------------
def _encoder_layer_kernel(x_ref,
                          ln1_w_ref, ln1_b_ref,
                          wqkv_ref, wo_ref,
                          w1_ref, b1_ref, w2_ref, b2_ref,
                          o_ref, *, heads):
    f32 = jnp.float32
    bf16 = jnp.bfloat16

    x = x_ref[0]                                   # (L, D) f32
    L, D = x.shape
    d_k = D // heads

    # --- self-attention block -------------------------------------------------
    z = _layer_norm(x, ln1_w_ref[...], ln1_b_ref[...])

    # fused Q/K/V projection: one bf16 MXU matmul with full-D contraction, f32 accumulation.
    # 1/sqrt(d_k) already folded into the Wq columns in the wrapper.
    qkv = jnp.dot(z.astype(bf16), wqkv_ref[...], preferred_element_type=f32)   # (L, 3D)
    qkv_b = qkv.astype(bf16)                        # single cast pass for the attention matmuls

    # head-major (H, L, d_k) operands via lane slices only (no sublane-axis reshapes)
    q3 = jnp.stack([qkv_b[:, h * d_k:(h + 1) * d_k] for h in range(heads)], axis=0)
    k3 = jnp.stack([qkv_b[:, D + h * d_k:D + (h + 1) * d_k] for h in range(heads)], axis=0)
    v3 = jnp.stack([qkv_b[:, 2 * D + h * d_k:2 * D + (h + 1) * d_k] for h in range(heads)], axis=0)

    # TODO(synk): for large L, tile this flash-style over a q-block grid axis instead of
    #             materializing the full (H, L, L) score tensor.
    s = jnp.einsum('hqd,hkd->hqk', q3, k3, preferred_element_type=f32)          # (H, L, L)
    s = s - jnp.max(s, axis=-1, keepdims=True)
    p = jnp.exp(s)
    p = p * pl.reciprocal(jnp.sum(p, axis=-1, keepdims=True), approx=True)      # softmax(dim=-1)
    o3 = jnp.einsum('hqk,hkd->hqd', p.astype(bf16), v3,
                    preferred_element_type=f32)                                  # (H, L, d_k)

    # concat heads back to (L, D) and apply Wo with a single full-D contraction
    o_cat = jnp.concatenate([o3[h] for h in range(heads)], axis=-1)              # (L, D)
    att = jnp.dot(o_cat.astype(bf16), wo_ref[...], preferred_element_type=f32)   # (L, D)

    # TODO(synk): dropout layers are identity here (p_dropout = 0.0 / eval mode)
    y = att + x

    # --- FFN block (ffn_norm affine folded into W1/b1 in the wrapper) ----------
    z2 = _layer_norm_noaffine(y)
    h1 = jnp.dot(z2.astype(bf16), w1_ref[...], preferred_element_type=f32) + b1_ref[...]
    h1 = _gelu_exact(h1)
    ffn = jnp.dot(h1.astype(bf16), w2_ref[...], preferred_element_type=f32) + b2_ref[...]

    o_ref[0] = (ffn + y).astype(o_ref.dtype)


# ---------------------------------------------------------------------------
# wrapper
# ---------------------------------------------------------------------------
def _vmem_limit_bytes(L, D, F, heads):
    # bf16 weights (effectively resident) + f32 IO blocks (double-buffered) + f32 intermediates
    bf, f32 = 2, 4
    weights = bf * (3 * D * D + D * D + 2 * D * F)
    small = f32 * (2 * D + F + D)
    io_blocks = f32 * L * D * 2
    interm = f32 * (3 * L * D + heads * L * L + L * F + 4 * L * D)
    est = 2 * weights + 4 * io_blocks + 2 * small + interm + (4 << 20)
    return int(min(100 * (1 << 20), max(32 * (1 << 20), est)))


def transformer_encoder_layer(x, params, *, heads):
    B, L, D = x.shape
    F = params["w1"].shape[1]
    d_k = D // heads
    inv_sqrt_dk = 1.0 / math.sqrt(d_k)

    # fuse QKV into one (D, 3D) weight with the attention scale folded into the Q columns,
    # and cast matmul weights to bf16 once (halves resident-weight VMEM / DMA traffic).
    # TODO(synk): for very large D/F on v7x (64 MiB VMEM), stream W1/W2 over an extra grid
    #             axis (or single-buffer the weight BlockSpecs) instead of keeping them resident.
    wqkv = jnp.concatenate(
        [params["wq"] * inv_sqrt_dk, params["wk"], params["wv"]], axis=1
    ).astype(jnp.bfloat16)
    wo = params["wo"].astype(jnp.bfloat16)

    # fold the ffn_norm affine into the first FFN linear:
    #   LN2(y) @ W1 + b1 == norm(y) @ (ln2_w^T * W1) + (ln2_b @ W1 + b1)
    w1 = (params["ln2_w"].reshape(D, 1) * params["w1"]).astype(jnp.bfloat16)
    b1 = (params["ln2_b"] @ params["w1"] + params["b1"]).astype(jnp.float32)      # (1, F)
    w2 = params["w2"].astype(jnp.bfloat16)

    def full(shape):
        return pl.BlockSpec(shape, lambda b: (0,) * len(shape))

    grid_spec = pltpu.PrefetchScalarGridSpec(
        num_scalar_prefetch=0,
        grid=(B,),
        in_specs=[
            pl.BlockSpec((1, L, D), lambda b: (b, 0, 0)),    # x
            full((1, D)), full((1, D)),                      # ln1 w, b
            full((D, 3 * D)),                                # Wqkv (fused, scale folded)
            full((D, D)),                                    # Wo
            full((D, F)), full((1, F)),                      # W1 (ln2-folded), b1'
            full((F, D)), full((1, D)),                      # W2, b2
        ],
        out_specs=pl.BlockSpec((1, L, D), lambda b: (b, 0, 0)),
    )

    return pl.pallas_call(
        functools.partial(_encoder_layer_kernel, heads=heads),
        grid_spec=grid_spec,
        out_shape=jax.ShapeDtypeStruct((B, L, D), jnp.float32),
        compiler_params=pltpu.CompilerParams(
            dimension_semantics=("parallel",),
            vmem_limit_bytes=_vmem_limit_bytes(L, D, F, heads),
        ),
    )(x,
      params["ln1_w"], params["ln1_b"],
      wqkv, wo,
      w1, b1, w2, params["b2"])


def init_params(key, d_model, d_ffn):
    ks = jax.random.split(key, 8)
    n = lambda k, shape, s=0.05: (jax.random.normal(k, shape, jnp.float32) * s)
    return {
        # LayerNorm params (PyTorch default init: weight=1, bias=0)
        "ln1_w": jnp.ones((1, d_model), jnp.float32),
        "ln1_b": jnp.zeros((1, d_model), jnp.float32),
        "ln2_w": jnp.ones((1, d_model), jnp.float32),
        "ln2_b": jnp.zeros((1, d_model), jnp.float32),
        # attention projections (bias=False), stored as (in, out)
        "wq": n(ks[0], (d_model, d_model)),
        "wk": n(ks[1], (d_model, d_model)),
        "wv": n(ks[2], (d_model, d_model)),
        "wo": n(ks[3], (d_model, d_model)),
        # FFN (nn.Linear default has bias)
        "w1": n(ks[4], (d_model, d_ffn)),
        "b1": n(ks[5], (1, d_ffn), 0.01),
        "w2": n(ks[6], (d_ffn, d_model)),
        "b2": n(ks[7], (1, d_model), 0.01),
    }


def _reference(x, params, heads):
    # pure-JAX f32 reference mirroring the PyTorch module (pre-LN, erf GELU, eps=1e-6)
    def ln(t, w, b):
        mu = t.mean(-1, keepdims=True)
        var = ((t - mu) ** 2).mean(-1, keepdims=True)
        return (t - mu) / jnp.sqrt(var + 1e-6) * w + b

    B, L, D = x.shape
    dk = D // heads
    z = ln(x, params["ln1_w"], params["ln1_b"])
    q = (z @ params["wq"]).reshape(B, L, heads, dk).transpose(0, 2, 1, 3)
    k = (z @ params["wk"]).reshape(B, L, heads, dk).transpose(0, 2, 1, 3)
    v = (z @ params["wv"]).reshape(B, L, heads, dk).transpose(0, 2, 1, 3)
    s = (q @ jnp.swapaxes(k, -1, -2)) / math.sqrt(dk)
    p = jax.nn.softmax(s, axis=-1)
    o = (p @ v).transpose(0, 2, 1, 3).reshape(B, L, D) @ params["wo"]
    y = o + x
    z2 = ln(y, params["ln2_w"], params["ln2_b"])
    h1 = jax.nn.gelu(z2 @ params["w1"] + params["b1"], approximate=False)
    return h1 @ params["w2"] + params["b2"] + y


if __name__ == "__main__":
    B, L, d_model, heads, d_ffn = 2, 8, 32, 4, 64

    key = jax.random.PRNGKey(0)
    kx, kp = jax.random.split(key)
    x = jax.random.normal(kx, (B, L, d_model), jnp.float32)
    params = init_params(kp, d_model, d_ffn)

    out = transformer_encoder_layer(x, params, heads=heads)
    jax.block_until_ready(out)
    assert out.shape == (B, L, d_model) and out.dtype == jnp.float32

    ref = _reference(x, params, heads)
    err = float(jnp.max(jnp.abs(out - ref)))
    # bf16 matmul operands + approx reciprocal -> small numerical difference vs f32 reference
    assert err < 5e-2, f"max abs err {err}"
    print("KERNEL_OK")
</pallas_src>

<mosaic_0001>
module attributes {stable_mosaic.version = 11 : i64} {
  func.func @_encoder_layer_kernel(%arg0: i32, %arg1: memref<1x8x32xf32, #tpu.memory_space<vmem>>, %arg2: memref<1x32xf32, #tpu.memory_space<vmem>>, %arg3: memref<1x32xf32, #tpu.memory_space<vmem>>, %arg4: memref<32x96xbf16, #tpu.memory_space<vmem>>, %arg5: memref<32x32xbf16, #tpu.memory_space<vmem>>, %arg6: memref<32x64xbf16, #tpu.memory_space<vmem>>, %arg7: memref<1x64xf32, #tpu.memory_space<vmem>>, %arg8: memref<64x32xbf16, #tpu.memory_space<vmem>>, %arg9: memref<1x32xf32, #tpu.memory_space<vmem>>, %arg10: memref<1x8x32xf32, #tpu.memory_space<vmem>>) attributes {dimension_semantics = [#tpu.dimension_semantics<parallel>], iteration_bounds = array<i64: 2>, scalar_prefetch = 0 : i64, scratch_operands = 0 : i64, tpu.core_type = #tpu.core_type<tc>, window_params = [{transform_indices = @transform_0, window_bounds = array<i64: 1, 8, 32>}, {pipeline_mode = #tpu.pipeline_mode<synchronous>, transform_indices = @transform_1, window_bounds = array<i64: 1, 32>}, {pipeline_mode = #tpu.pipeline_mode<synchronous>, transform_indices = @transform_2, window_bounds = array<i64: 1, 32>}, {pipeline_mode = #tpu.pipeline_mode<synchronous>, transform_indices = @transform_3, window_bounds = array<i64: 32, 96>}, {pipeline_mode = #tpu.pipeline_mode<synchronous>, transform_indices = @transform_4, window_bounds = array<i64: 32, 32>}, {pipeline_mode = #tpu.pipeline_mode<synchronous>, transform_indices = @transform_5, window_bounds = array<i64: 32, 64>}, {pipeline_mode = #tpu.pipeline_mode<synchronous>, transform_indices = @transform_6, window_bounds = array<i64: 1, 64>}, {pipeline_mode = #tpu.pipeline_mode<synchronous>, transform_indices = @transform_7, window_bounds = array<i64: 64, 32>}, {pipeline_mode = #tpu.pipeline_mode<synchronous>, transform_indices = @transform_8, window_bounds = array<i64: 1, 32>}, {transform_indices = @transform_9, window_bounds = array<i64: 1, 8, 32>}]} {
    %c0 = arith.constant 0 : index
    %c0_0 = arith.constant 0 : index
    %c0_1 = arith.constant 0 : index
    %0 = vector.load %arg1[%c0, %c0_0, %c0_1] : memref<1x8x32xf32, #tpu.memory_space<vmem>>, vector<1x8x32xf32>
    %1 = vector.shape_cast %0 : vector<1x8x32xf32> to vector<8x32xf32>
    %c0_2 = arith.constant 0 : index
    %c0_3 = arith.constant 0 : index
    %2 = vector.load %arg2[%c0_2, %c0_3] : memref<1x32xf32, #tpu.memory_space<vmem>>, vector<1x32xf32>
    %c0_4 = arith.constant 0 : index
    %c0_5 = arith.constant 0 : index
    %3 = vector.load %arg3[%c0_4, %c0_5] : memref<1x32xf32, #tpu.memory_space<vmem>>, vector<1x32xf32>
    %cst = arith.constant dense<0.000000e+00> : vector<8xf32>
    %4 = vector.multi_reduction <add>, %1, %cst [1] : vector<8x32xf32> to vector<8xf32>
    %5 = vector.shape_cast %4 : vector<8xf32> to vector<8x1xf32>
    %cst_6 = arith.constant 3.200000e+01 : f32
    %6 = vector.broadcast %cst_6 : f32 to vector<8x1xf32>
    %7 = arith.divf %5, %6 : vector<8x1xf32>
    %8 = vector.broadcast %7 : vector<8x1xf32> to vector<8x32xf32>
    %9 = arith.subf %1, %8 : vector<8x32xf32>
    %10 = arith.mulf %9, %9 : vector<8x32xf32>
    %cst_7 = arith.constant dense<0.000000e+00> : vector<8xf32>
    %11 = vector.multi_reduction <add>, %10, %cst_7 [1] : vector<8x32xf32> to vector<8xf32>
    %12 = vector.shape_cast %11 : vector<8xf32> to vector<8x1xf32>
    %cst_8 = arith.constant 3.200000e+01 : f32
    %13 = vector.broadcast %cst_8 : f32 to vector<8x1xf32>
    %14 = arith.divf %12, %13 : vector<8x1xf32>
    %cst_9 = arith.constant 9.99999997E-7 : f32
    %15 = vector.broadcast %cst_9 : f32 to vector<8x1xf32>
    %16 = arith.addf %14, %15 : vector<8x1xf32>
    %17 = math.rsqrt %16 : vector<8x1xf32>
    %18 = vector.broadcast %17 : vector<8x1xf32> to vector<8x32xf32>
    %19 = arith.mulf %9, %18 : vector<8x32xf32>
    %20 = vector.broadcast %2 : vector<1x32xf32> to vector<8x32xf32>
    %21 = arith.mulf %19, %20 : vector<8x32xf32>
    %22 = vector.broadcast %3 : vector<1x32xf32> to vector<8x32xf32>
    %23 = arith.addf %21, %22 : vector<8x32xf32>
    %24 = arith.truncf %23 : vector<8x32xf32> to vector<8x32xbf16>
    %c0_10 = arith.constant 0 : index
    %c0_11 = arith.constant 0 : index
    %25 = vector.load %arg4[%c0_10, %c0_11] : memref<32x96xbf16, #tpu.memory_space<vmem>>, vector<32x96xbf16>
    %cst_12 = arith.constant dense<0.000000e+00> : vector<8x96xf32>
    %26 = tpu.matmul %24, %25, %cst_12 {dimension_numbers = #tpu.dot_dimension_numbers<[1], [0], [0], [1], [0, 0, 1, 1], [], []>} : vector<8x32xbf16>, vector<32x96xbf16>, vector<8x96xf32> -> vector<8x96xf32>
    %27 = arith.truncf %26 : vector<8x96xf32> to vector<8x96xbf16>
    %28 = vector.extract_strided_slice %27 {offsets = [0, 0], sizes = [8, 8], strides = [1, 1]} : vector<8x96xbf16> to vector<8x8xbf16>
    %29 = vector.extract_strided_slice %27 {offsets = [0, 8], sizes = [8, 8], strides = [1, 1]} : vector<8x96xbf16> to vector<8x8xbf16>
    %30 = vector.extract_strided_slice %27 {offsets = [0, 16], sizes = [8, 8], strides = [1, 1]} : vector<8x96xbf16> to vector<8x8xbf16>
    %31 = vector.extract_strided_slice %27 {offsets = [0, 24], sizes = [8, 8], strides = [1, 1]} : vector<8x96xbf16> to vector<8x8xbf16>
    %32 = vector.shape_cast %28 : vector<8x8xbf16> to vector<1x8x8xbf16>
    %33 = vector.shape_cast %29 : vector<8x8xbf16> to vector<1x8x8xbf16>
    %34 = vector.shape_cast %30 : vector<8x8xbf16> to vector<1x8x8xbf16>
    %35 = vector.shape_cast %31 : vector<8x8xbf16> to vector<1x8x8xbf16>
    %36 = tpu.concatenate %32, %33, %34, %35 in 0 : vector<1x8x8xbf16>, vector<1x8x8xbf16>, vector<1x8x8xbf16>, vector<1x8x8xbf16> -> vector<4x8x8xbf16>
    %37 = vector.extract_strided_slice %27 {offsets = [0, 32], sizes = [8, 8], strides = [1, 1]} : vector<8x96xbf16> to vector<8x8xbf16>
    %38 = vector.extract_strided_slice %27 {offsets = [0, 40], sizes = [8, 8], strides = [1, 1]} : vector<8x96xbf16> to vector<8x8xbf16>
    %39 = vector.extract_strided_slice %27 {offsets = [0, 48], sizes = [8, 8], strides = [1, 1]} : vector<8x96xbf16> to vector<8x8xbf16>
    %40 = vector.extract_strided_slice %27 {offsets = [0, 56], sizes = [8, 8], strides = [1, 1]} : vector<8x96xbf16> to vector<8x8xbf16>
    %41 = vector.shape_cast %37 : vector<8x8xbf16> to vector<1x8x8xbf16>
    %42 = vector.shape_cast %38 : vector<8x8xbf16> to vector<1x8x8xbf16>
    %43 = vector.shape_cast %39 : vector<8x8xbf16> to vector<1x8x8xbf16>
    %44 = vector.shape_cast %40 : vector<8x8xbf16> to vector<1x8x8xbf16>
    %45 = tpu.concatenate %41, %42, %43, %44 in 0 : vector<1x8x8xbf16>, vector<1x8x8xbf16>, vector<1x8x8xbf16>, vector<1x8x8xbf16> -> vector<4x8x8xbf16>
    %46 = vector.extract_strided_slice %27 {offsets = [0, 64], sizes = [8, 8], strides = [1, 1]} : vector<8x96xbf16> to vector<8x8xbf16>
    %47 = vector.extract_strided_slice %27 {offsets = [0, 72], sizes = [8, 8], strides = [1, 1]} : vector<8x96xbf16> to vector<8x8xbf16>
    %48 = vector.extract_strided_slice %27 {offsets = [0, 80], sizes = [8, 8], strides = [1, 1]} : vector<8x96xbf16> to vector<8x8xbf16>
    %49 = vector.extract_strided_slice %27 {offsets = [0, 88], sizes = [8, 8], strides = [1, 1]} : vector<8x96xbf16> to vector<8x8xbf16>
    %50 = vector.shape_cast %46 : vector<8x8xbf16> to vector<1x8x8xbf16>
    %51 = vector.shape_cast %47 : vector<8x8xbf16> to vector<1x8x8xbf16>
    %52 = vector.shape_cast %48 : vector<8x8xbf16> to vector<1x8x8xbf16>
    %53 = vector.shape_cast %49 : vector<8x8xbf16> to vector<1x8x8xbf16>
    %54 = tpu.concatenate %50, %51, %52, %53 in 0 : vector<1x8x8xbf16>, vector<1x8x8xbf16>, vector<1x8x8xbf16>, vector<1x8x8xbf16> -> vector<4x8x8xbf16>
    "tpu.trace_start"() <{level = 10 : i32, message = "hqd,hkd->hqk"}> : () -> ()
    %cst_13 = arith.constant dense<0.000000e+00> : vector<4x8x8xf32>
    %55 = tpu.matmul %36, %45, %cst_13 {dimension_numbers = #tpu.dot_dimension_numbers<[2], [2], [1], [1], [0, 0, 0, 1, 1, 1], [0], [0]>} : vector<4x8x8xbf16>, vector<4x8x8xbf16>, vector<4x8x8xf32> -> vector<4x8x8xf32>
    "tpu.trace_stop"() : () -> ()
    %cst_14 = arith.constant dense<0xFF800000> : vector<4x8xf32>
    %56 = vector.multi_reduction <maximumf>, %55, %cst_14 [2] : vector<4x8x8xf32> to vector<4x8xf32>
    %57 = vector.shape_cast %56 : vector<4x8xf32> to vector<4x8x1xf32>
    %58 = vector.broadcast %57 : vector<4x8x1xf32> to vector<4x8x8xf32>
    %59 = arith.subf %55, %58 : vector<4x8x8xf32>
    %60 = math.exp %59 : vector<4x8x8xf32>
    %cst_15 = arith.constant dense<0.000000e+00> : vector<4x8xf32>
    %61 = vector.multi_reduction <add>, %60, %cst_15 [2] : vector<4x8x8xf32> to vector<4x8xf32>
    %62 = vector.shape_cast %61 : vector<4x8xf32> to vector<4x8x1xf32>
    %63 = tpu.reciprocal %62 {approx = true} : vector<4x8x1xf32> -> vector<4x8x1xf32>
    %64 = vector.broadcast %63 : vector<4x8x1xf32> to vector<4x8x8xf32>
    %65 = arith.mulf %60, %64 : vector<4x8x8xf32>
    %66 = arith.truncf %65 : vector<4x8x8xf32> to vector<4x8x8xbf16>
    "tpu.trace_start"() <{level = 10 : i32, message = "hqk,hkd->hqd"}> : () -> ()
    %cst_16 = arith.constant dense<0.000000e+00> : vector<4x8x8xf32>
    %67 = tpu.matmul %66, %54, %cst_16 {dimension_numbers = #tpu.dot_dimension_numbers<[2], [1], [1], [2], [0, 0, 0, 1, 1, 2], [0], [0]>} : vector<4x8x8xbf16>, vector<4x8x8xbf16>, vector<4x8x8xf32> -> vector<4x8x8xf32>
    "tpu.trace_stop"() : () -> ()
    %68 = vector.extract_strided_slice %67 {offsets = [0, 0, 0], sizes = [1, 8, 8], strides = [1, 1, 1]} : vector<4x8x8xf32> to vector<1x8x8xf32>
    %69 = vector.shape_cast %68 : vector<1x8x8xf32> to vector<8x8xf32>
    %70 = vector.extract_strided_slice %67 {offsets = [1, 0, 0], sizes = [1, 8, 8], strides = [1, 1, 1]} : vector<4x8x8xf32> to vector<1x8x8xf32>
    %71 = vector.shape_cast %70 : vector<1x8x8xf32> to vector<8x8xf32>
    %72 = vector.extract_strided_slice %67 {offsets = [2, 0, 0], sizes = [1, 8, 8], strides = [1, 1, 1]} : vector<4x8x8xf32> to vector<1x8x8xf32>
    %73 = vector.shape_cast %72 : vector<1x8x8xf32> to vector<8x8xf32>
    %74 = vector.extract_strided_slice %67 {offsets = [3, 0, 0], sizes = [1, 8, 8], strides = [1, 1, 1]} : vector<4x8x8xf32> to vector<1x8x8xf32>
    %75 = vector.shape_cast %74 : vector<1x8x8xf32> to vector<8x8xf32>
    %76 = tpu.concatenate %69, %71, %73, %75 in 1 : vector<8x8xf32>, vector<8x8xf32>, vector<8x8xf32>, vector<8x8xf32> -> vector<8x32xf32>
    %77 = arith.truncf %76 : vector<8x32xf32> to vector<8x32xbf16>
    %c0_17 = arith.constant 0 : index
    %c0_18 = arith.constant 0 : index
    %78 = vector.load %arg5[%c0_17, %c0_18] : memref<32x32xbf16, #tpu.memory_space<vmem>>, vector<32x32xbf16>
    %cst_19 = arith.constant dense<0.000000e+00> : vector<8x32xf32>
    %79 = tpu.matmul %77, %78, %cst_19 {dimension_numbers = #tpu.dot_dimension_numbers<[1], [0], [0], [1], [0, 0, 1, 1], [], []>} : vector<8x32xbf16>, vector<32x32xbf16>, vector<8x32xf32> -> vector<8x32xf32>
    %80 = arith.addf %79, %1 : vector<8x32xf32>
    %cst_20 = arith.constant dense<0.000000e+00> : vector<8xf32>
    %81 = vector.multi_reduction <add>, %80, %cst_20 [1] : vector<8x32xf32> to vector<8xf32>
    %82 = vector.shape_cast %81 : vector<8xf32> to vector<8x1xf32>
    %cst_21 = arith.constant 3.200000e+01 : f32
    %83 = vector.broadcast %cst_21 : f32 to vector<8x1xf32>
    %84 = arith.divf %82, %83 : vector<8x1xf32>
    %85 = vector.broadcast %84 : vector<8x1xf32> to vector<8x32xf32>
    %86 = arith.subf %80, %85 : vector<8x32xf32>
    %87 = arith.mulf %86, %86 : vector<8x32xf32>
    %cst_22 = arith.constant dense<0.000000e+00> : vector<8xf32>
    %88 = vector.multi_reduction <add>, %87, %cst_22 [1] : vector<8x32xf32> to vector<8xf32>
    %89 = vector.shape_cast %88 : vector<8xf32> to vector<8x1xf32>
    %cst_23 = arith.constant 3.200000e+01 : f32
    %90 = vector.broadcast %cst_23 : f32 to vector<8x1xf32>
    %91 = arith.divf %89, %90 : vector<8x1xf32>
    %cst_24 = arith.constant 9.99999997E-7 : f32
    %92 = vector.broadcast %cst_24 : f32 to vector<8x1xf32>
    %93 = arith.addf %91, %92 : vector<8x1xf32>
    %94 = math.rsqrt %93 : vector<8x1xf32>
    %95 = vector.broadcast %94 : vector<8x1xf32> to vector<8x32xf32>
    %96 = arith.mulf %86, %95 : vector<8x32xf32>
    %97 = arith.truncf %96 : vector<8x32xf32> to vector<8x32xbf16>
    %c0_25 = arith.constant 0 : index
    %c0_26 = arith.constant 0 : index
    %98 = vector.load %arg6[%c0_25, %c0_26] : memref<32x64xbf16, #tpu.memory_space<vmem>>, vector<32x64xbf16>
    %cst_27 = arith.constant dense<0.000000e+00> : vector<8x64xf32>
    %99 = tpu.matmul %97, %98, %cst_27 {dimension_numbers = #tpu.dot_dimension_numbers<[1], [0], [0], [1], [0, 0, 1, 1], [], []>} : vector<8x32xbf16>, vector<32x64xbf16>, vector<8x64xf32> -> vector<8x64xf32>
    %c0_28 = arith.constant 0 : index
    %c0_29 = arith.constant 0 : index
    %100 = vector.load %arg7[%c0_28, %c0_29] : memref<1x64xf32, #tpu.memory_space<vmem>>, vector<1x64xf32>
    %101 = vector.broadcast %100 : vector<1x64xf32> to vector<8x64xf32>
    %102 = arith.addf %99, %101 : vector<8x64xf32>
    %cst_30 = arith.constant 5.000000e-01 : f32
    %103 = vector.broadcast %cst_30 : f32 to vector<8x64xf32>
    %104 = arith.mulf %103, %102 : vector<8x64xf32>
    %cst_31 = arith.constant 0.707106769 : f32
    %105 = vector.broadcast %cst_31 : f32 to vector<8x64xf32>
    %106 = arith.mulf %102, %105 : vector<8x64xf32>
    %107 = math.absf %106 : vector<8x64xf32>
    %cst_32 = arith.constant 0.327591091 : f32
    %108 = vector.broadcast %cst_32 : f32 to vector<8x64xf32>
    %109 = arith.mulf %108, %107 : vector<8x64xf32>
    %cst_33 = arith.constant 1.000000e+00 : f32
    %110 = vector.broadcast %cst_33 : f32 to vector<8x64xf32>
    %111 = arith.addf %110, %109 : vector<8x64xf32>
    %cst_34 = arith.constant 1.000000e+00 : f32
    %112 = vector.broadcast %cst_34 : f32 to vector<8x64xf32>
    %113 = arith.divf %112, %111 : vector<8x64xf32>
    %cst_35 = arith.constant 1.06140542 : f32
    %114 = vector.broadcast %cst_35 : f32 to vector<8x64xf32>
    %115 = arith.mulf %114, %113 : vector<8x64xf32>
    %cst_36 = arith.constant -1.45315206 : f32
    %116 = vector.broadcast %cst_36 : f32 to vector<8x64xf32>
    %117 = arith.addf %115, %116 : vector<8x64xf32>
    %118 = arith.mulf %117, %113 : vector<8x64xf32>
    %cst_37 = arith.constant 1.42141378 : f32
    %119 = vector.broadcast %cst_37 : f32 to vector<8x64xf32>
    %120 = arith.addf %118, %119 : vector<8x64xf32>
    %121 = arith.mulf %120, %113 : vector<8x64xf32>
    %cst_38 = arith.constant -0.284496725 : f32
    %122 = vector.broadcast %cst_38 : f32 to vector<8x64xf32>
    %123 = arith.addf %121, %122 : vector<8x64xf32>
    %124 = arith.mulf %123, %113 : vector<8x64xf32>
    %cst_39 = arith.constant 0.254829586 : f32
    %125 = vector.broadcast %cst_39 : f32 to vector<8x64xf32>
    %126 = arith.addf %124, %125 : vector<8x64xf32>
    %127 = arith.mulf %126, %113 : vector<8x64xf32>
    %cst_40 = arith.constant 0.000000e+00 : f32
    %128 = vector.broadcast %cst_40 : f32 to vector<8x64xf32>
    %129 = arith.subf %128, %107 : vector<8x64xf32>
    %130 = arith.mulf %129, %107 : vector<8x64xf32>
    %131 = math.exp %130 : vector<8x64xf32>
    %132 = arith.mulf %127, %131 : vector<8x64xf32>
    %cst_41 = arith.constant 1.000000e+00 : f32
    %133 = vector.broadcast %cst_41 : f32 to vector<8x64xf32>
    %134 = arith.subf %133, %132 : vector<8x64xf32>
    %cst_42 = arith.constant 0.000000e+00 : f32
    %135 = vector.broadcast %cst_42 : f32 to vector<8x64xf32>
    %136 = arith.cmpf oge, %106, %135 : vector<8x64xf32>
    %cst_43 = arith.constant 0.000000e+00 : f32
    %137 = vector.broadcast %cst_43 : f32 to vector<8x64xf32>
    %138 = arith.subf %137, %134 : vector<8x64xf32>
    %139 = arith.select %136, %134, %138 : vector<8x64xi1>, vector<8x64xf32>
    %cst_44 = arith.constant 1.000000e+00 : f32
    %140 = vector.broadcast %cst_44 : f32 to vector<8x64xf32>
    %141 = arith.addf %140, %139 : vector<8x64xf32>
    %142 = arith.mulf %104, %141 : vector<8x64xf32>
    %143 = arith.truncf %142 : vector<8x64xf32> to vector<8x64xbf16>
    %c0_45 = arith.constant 0 : index
    %c0_46 = arith.constant 0 : index
    %144 = vector.load %arg8[%c0_45, %c0_46] : memref<64x32xbf16, #tpu.memory_space<vmem>>, vector<64x32xbf16>
    %cst_47 = arith.constant dense<0.000000e+00> : vector<8x32xf32>
    %145 = tpu.matmul %143, %144, %cst_47 {dimension_numbers = #tpu.dot_dimension_numbers<[1], [0], [0], [1], [0, 0, 1, 1], [], []>} : vector<8x64xbf16>, vector<64x32xbf16>, vector<8x32xf32> -> vector<8x32xf32>
    %c0_48 = arith.constant 0 : index
    %c0_49 = arith.constant 0 : index
    %146 = vector.load %arg9[%c0_48, %c0_49] : memref<1x32xf32, #tpu.memory_space<vmem>>, vector<1x32xf32>
    %147 = vector.broadcast %146 : vector<1x32xf32> to vector<8x32xf32>
    %148 = arith.addf %145, %147 : vector<8x32xf32>
    %149 = arith.addf %148, %80 : vector<8x32xf32>
    %c0_50 = arith.constant 0 : index
    %c0_51 = arith.constant 0 : index
    %c0_52 = arith.constant 0 : index
    %150 = vector.load %arg10[%c0_50, %c0_51, %c0_52] : memref<1x8x32xf32, #tpu.memory_space<vmem>>, vector<1x8x32xf32>
    %151 = vector.shape_cast %150 : vector<1x8x32xf32> to vector<8x32xf32>
    %152 = vector.shape_cast %149 : vector<8x32xf32> to vector<1x8x32xf32>
    tpu.vector_store %arg10[%c0_50, %c0_51, %c0_52], %152 {strides = array<i32>} : memref<1x8x32xf32, #tpu.memory_space<vmem>>, vector<1x8x32xf32>,
    return
  }
  func.func @transform_0(%arg0: i32) -> (i32, i32, i32) {
    %c0_i32 = arith.constant 0 : i32
    %c0_i32_0 = arith.constant 0 : i32
    %c0_i32_1 = arith.constant 0 : i32
    return %arg0, %c0_i32, %c0_i32_0 : i32, i32, i32
  }
  func.func @transform_1(%arg0: i32) -> (i32, i32) {
    %c0_i32 = arith.constant 0 : i32
    %c0_i32_0 = arith.constant 0 : i32
    %c0_i32_1 = arith.constant 0 : i32
    return %c0_i32, %c0_i32_0 : i32, i32
  }
  func.func @transform_2(%arg0: i32) -> (i32, i32) {
    %c0_i32 = arith.constant 0 : i32
    %c0_i32_0 = arith.constant 0 : i32
    %c0_i32_1 = arith.constant 0 : i32
    return %c0_i32, %c0_i32_0 : i32, i32
  }
  func.func @transform_3(%arg0: i32) -> (i32, i32) {
    %c0_i32 = arith.constant 0 : i32
    %c0_i32_0 = arith.constant 0 : i32
    %c0_i32_1 = arith.constant 0 : i32
    return %c0_i32, %c0_i32_0 : i32, i32
  }
  func.func @transform_4(%arg0: i32) -> (i32, i32) {
    %c0_i32 = arith.constant 0 : i32
    %c0_i32_0 = arith.constant 0 : i32
    %c0_i32_1 = arith.constant 0 : i32
    return %c0_i32, %c0_i32_0 : i32, i32
  }
  func.func @transform_5(%arg0: i32) -> (i32, i32) {
    %c0_i32 = arith.constant 0 : i32
    %c0_i32_0 = arith.constant 0 : i32
    %c0_i32_1 = arith.constant 0 : i32
    return %c0_i32, %c0_i32_0 : i32, i32
  }
  func.func @transform_6(%arg0: i32) -> (i32, i32) {
    %c0_i32 = arith.constant 0 : i32
    %c0_i32_0 = arith.constant 0 : i32
    %c0_i32_1 = arith.constant 0 : i32
    return %c0_i32, %c0_i32_0 : i32, i32
  }
  func.func @transform_7(%arg0: i32) -> (i32, i32) {
    %c0_i32 = arith.constant 0 : i32
    %c0_i32_0 = arith.constant 0 : i32
    %c0_i32_1 = arith.constant 0 : i32
    return %c0_i32, %c0_i32_0 : i32, i32
  }
  func.func @transform_8(%arg0: i32) -> (i32, i32) {
    %c0_i32 = arith.constant 0 : i32
    %c0_i32_0 = arith.constant 0 : i32
    %c0_i32_1 = arith.constant 0 : i32
    return %c0_i32, %c0_i32_0 : i32, i32
  }
  func.func @transform_9(%arg0: i32) -> (i32, i32, i32) {
    %c0_i32 = arith.constant 0 : i32
    %c0_i32_0 = arith.constant 0 : i32
    %c0_i32_1 = arith.constant 0 : i32
    return %arg0, %c0_i32, %c0_i32_0 : i32, i32, i32
  }
}

</mosaic_0001>

<llo_original>
// kernel: tpu_custom_call.1
$region0: #{tpu_custom_call.1}
  #allocation0 [shape = 'u32[]', space=smem, size = 0x4, offset = 0x4, fixed_abs, tag = 'smem constant byte address 0x4 - core index']
  #allocation1 [shape = 'u32[72,128]{1,0:T(1,128)}', space=vmem, size = 0x9000, scoped, tag = 'internal scratch']
  %s0 = inlined_call_operand.vmem [shape: f32[2,8,32], index: 0, kind: input, shape index: {}]
  %s1 = inlined_call_operand.hbm [shape: f32[1,32], index: 1, kind: input, shape index: {}]
  %s2 = inlined_call_operand.vmem [shape: f32[1,32], index: 2, kind: input, shape index: {}]
  %s3 = inlined_call_operand.vmem [shape: bf16[32,96], index: 3, kind: input, shape index: {}]
  %s4 = inlined_call_operand.vmem [shape: bf16[32,32], index: 4, kind: input, shape index: {}]
  %s5 = inlined_call_operand.hbm [shape: bf16[32,64], index: 5, kind: input, shape index: {}]
  %s6 = inlined_call_operand.vmem [shape: f32[1,64], index: 6, kind: input, shape index: {}]
  %s7 = inlined_call_operand.vmem [shape: bf16[64,32], index: 7, kind: input, shape index: {}]
  %s8 = inlined_call_operand.vmem [shape: f32[1,32], index: 8, kind: input, shape index: {}]
  %s9 = inlined_call_operand.hbm [shape: f32[2,8,32], index: 9, kind: output, shape index: {}]
  %s10 = sld [smem:[#allocation0]]
  $region77: #{tpu_custom_call.1} parent=0
    _
  %s12 = ssub.s32 1, %s10
  %s13 = scalar_select 0, %s12, %s10
  $region1: #{tpu_custom_call.1} parent=0
    #allocation2 [shape = 'u8[512]{0}', space=vmem, size = 0x400, scoped, tag = 'input window, operand 1, single buffered']
    #allocation3 [shape = 's32[2]{0}', space=sflag, size = 0x8, scoped, tag = 'scoped memory for tpu_custom_call.1']
    #allocation4 [shape = 's32[2]{0}', space=sflag, size = 0x8, scoped, tag = 'scoped memory for tpu_custom_call.1']
    #allocation5 [shape = 'u8[8192]{0}', space=vmem, size = 0x2000, scoped, tag = 'input window, operand 5, single buffered']
    #allocation6 [shape = 's32[1]{0}', space=sflag, size = 0x4, scoped, tag = 'scoped memory for tpu_custom_call.1']
    #allocation7 [shape = 'u8[8192]{0}', space=vmem, size = 0x2000, scoped, tag = 'output window, operand 0']
    %14 = vsyncpa [#allocation3], 0
    %15 = vsyncpa [#allocation6], 0
    %16 = vsyncpa [#allocation4], 0
    %s17 = scalar_lea.sflag [#allocation4], 1
    %18 = vsyncpa %s17, 0
    loop: start=0, step=1, limit=4
    $region2: #{tpu_custom_call.1} parent=1 // loop_pre_header
      _
    $region3: #{tpu_custom_call.1} parent=1 // loop_header
      %s20 = sphi 0, %s24
      %p21 = scmp.ge.s32.totalorder %s20, 4
      %s30 = sphi 0, %s32
      %s33 = sphi 0, %s30
      %s34 = sphi 0, %s33
      %s50 = sphi 0, %s34
      %s54 = sphi 0, %s54
      %s56 = sphi 0, %s54
      %s57 = sphi 0, %s56
      %s71 = sphi 0, %s57
      %s75 = sphi 0, %s75
      %s77 = sphi 0, %s75
      %s78 = sphi 0, %s77
      %s92 = sphi 0, %s78
      %s96 = sphi 0, %s96
      %s98 = sphi 0, %s96
      %s99 = sphi 0, %s98
      %s113 = sphi 0, %s99
      %s117 = sphi 0, %s117
      %s119 = sphi 0, %s117
      %s120 = sphi 0, %s119
      %s134 = sphi 0, %s120
      %s138 = sphi 0, %s138
      %s140 = sphi 0, %s138
      %s141 = sphi 0, %s140
      %s155 = sphi 0, %s141
      %s159 = sphi 0, %s159
      %s161 = sphi 0, %s159
      %s162 = sphi 0, %s161
      %s176 = sphi 0, %s162
      %s180 = sphi 0, %s180
      %s182 = sphi 0, %s180
      %s183 = sphi 0, %s182
      %s197 = sphi 0, %s183
      %s201 = sphi 0, %s201
      %s203 = sphi 0, %s201
      %s204 = sphi 0, %s203
      %s218 = sphi 0, %s204
      %s224 = sphi 0, %s226
      %s227 = sphi 0, %s224
      %s228 = sphi 0, %s227
      %s244 = sphi 0, %s228
    $region4: #{tpu_custom_call.1} parent=1 // loop_header_branch
      %23 = sbr.rel (%p21) target = $region8
    $region5: #{tpu_custom_call.1} parent=1 // loop_body
      %s25 = ssub.s32 %s20, 1
      %s26 = ssub.s32 %s20, 2
      %s27 = sadd.s32 %s20, 1
      %s28 = ssub.s32 %s20, %s27
      %p29 = scmp.eq.s32.totalorder %s28, 0
      %s31 = sadd.s32 %s30, 1
      %s32 = scalar_select %p29, %s30, %s31
      %p35 = pneg %p29
      %p36 = scmp.eq.s32.totalorder %s20, 1
      %p37 = por %p35, %p36
      %p38 = scmp.ne.s32.totalorder %s30, %s33
      %p39 = scmp.eq.s32.totalorder %s20, 0
      %p40 = por %p38, %p39
      %p41 = scmp.ne.s32.totalorder %s30, %s33
      %p42 = scmp.eq.s32.totalorder %s25, 1
      %p43 = por %p41, %p42
      %p44 = scmp.ne.s32.totalorder %s33, %s34
      %p45 = scmp.eq.s32.totalorder %s25, 0
      %p46 = por %p44, %p45
      %p47 = scmp.ne.s32.totalorder %s33, %s34
      %p48 = scmp.eq.s32.totalorder %s26, 1
      %p49 = por %p47, %p48
      %p51 = scmp.ne.s32.totalorder %s34, %s50
      %p52 = scmp.eq.s32.totalorder %s26, 0
      %p53 = por %p51, %p52
      %s55 = sadd.s32 %s54, 1
      %p58 = scmp.eq.s32.totalorder %s20, 1
      %p59 = scmp.ne.s32.totalorder %s54, %s56
      %p60 = scmp.eq.s32.totalorder %s20, 0
      %p61 = por %p59, %p60
      %p62 = scmp.ne.s32.totalorder %s54, %s56
      %p63 = scmp.eq.s32.totalorder %s25, 1
      %p64 = por %p62, %p63
      %p65 = scmp.ne.s32.totalorder %s56, %s57
      %p66 = scmp.eq.s32.totalorder %s25, 0
      %p67 = por %p65, %p66
      %p68 = scmp.ne.s32.totalorder %s56, %s57
      %p69 = scmp.eq.s32.totalorder %s26, 1
      %p70 = por %p68, %p69
      %p72 = scmp.ne.s32.totalorder %s57, %s71
      %p73 = scmp.eq.s32.totalorder %s26, 0
      %p74 = por %p72, %p73
      %s76 = sadd.s32 %s75, 1
      %p79 = scmp.eq.s32.totalorder %s20, 1
      %p80 = scmp.ne.s32.totalorder %s75, %s77
      %p81 = scmp.eq.s32.totalorder %s20, 0
      %p82 = por %p80, %p81
      %p83 = scmp.ne.s32.totalorder %s75, %s77
      %p84 = scmp.eq.s32.totalorder %s25, 1
      %p85 = por %p83, %p84
      %p86 = scmp.ne.s32.totalorder %s77, %s78
      %p87 = scmp.eq.s32.totalorder %s25, 0
      %p88 = por %p86, %p87
      %p89 = scmp.ne.s32.totalorder %s77, %s78
      %p90 = scmp.eq.s32.totalorder %s26, 1
      %p91 = por %p89, %p90
      %p93 = scmp.ne.s32.totalorder %s78, %s92
      %p94 = scmp.eq.s32.totalorder %s26, 0
      %p95 = por %p93, %p94
      %s97 = sadd.s32 %s96, 1
      %p100 = scmp.eq.s32.totalorder %s20, 1
      %p101 = scmp.ne.s32.totalorder %s96, %s98
      %p102 = scmp.eq.s32.totalorder %s20, 0
      %p103 = por %p101, %p102
      %p104 = scmp.ne.s32.totalorder %s96, %s98
      %p105 = scmp.eq.s32.totalorder %s25, 1
      %p106 = por %p104, %p105
      %p107 = scmp.ne.s32.totalorder %s98, %s99
      %p108 = scmp.eq.s32.totalorder %s25, 0
      %p109 = por %p107, %p108
      %p110 = scmp.ne.s32.totalorder %s98, %s99
      %p111 = scmp.eq.s32.totalorder %s26, 1
      %p112 = por %p110, %p111
      %p114 = scmp.ne.s32.totalorder %s99, %s113
      %p115 = scmp.eq.s32.totalorder %s26, 0
      %p116 = por %p114, %p115
      %s118 = sadd.s32 %s117, 1
      %p121 = scmp.eq.s32.totalorder %s20, 1
      %p122 = scmp.ne.s32.totalorder %s117, %s119
      %p123 = scmp.eq.s32.totalorder %s20, 0
      %p124 = por %p122, %p123
      %p125 = scmp.ne.s32.totalorder %s117, %s119
      %p126 = scmp.eq.s32.totalorder %s25, 1
      %p127 = por %p125, %p126
      %p128 = scmp.ne.s32.totalorder %s119, %s120
      %p129 = scmp.eq.s32.totalorder %s25, 0
      %p130 = por %p128, %p129
      %p131 = scmp.ne.s32.totalorder %s119, %s120
      %p132 = scmp.eq.s32.totalorder %s26, 1
      %p133 = por %p131, %p132
      %p135 = scmp.ne.s32.totalorder %s120, %s134
      %p136 = scmp.eq.s32.totalorder %s26, 0
      %p137 = por %p135, %p136
      %s139 = sadd.s32 %s138, 1
      %p142 = scmp.eq.s32.totalorder %s20, 1
      %p143 = scmp.ne.s32.totalorder %s138, %s140
      %p144 = scmp.eq.s32.totalorder %s20, 0
      %p145 = por %p143, %p144
      %p146 = scmp.ne.s32.totalorder %s138, %s140
      %p147 = scmp.eq.s32.totalorder %s25, 1
      %p148 = por %p146, %p147
      %p149 = scmp.ne.s32.totalorder %s140, %s141
      %p150 = scmp.eq.s32.totalorder %s25, 0
      %p151 = por %p149, %p150
      %p152 = scmp.ne.s32.totalorder %s140, %s141
      %p153 = scmp.eq.s32.totalorder %s26, 1
      %p154 = por %p152, %p153
      %p156 = scmp.ne.s32.totalorder %s141, %s155
      %p157 = scmp.eq.s32.totalorder %s26, 0
      %p158 = por %p156, %p157
      %s160 = sadd.s32 %s159, 1
      %p163 = scmp.eq.s32.totalorder %s20, 1
      %p164 = scmp.ne.s32.totalorder %s159, %s161
      %p165 = scmp.eq.s32.totalorder %s20, 0
      %p166 = por %p164, %p165
      %p167 = scmp.ne.s32.totalorder %s159, %s161
      %p168 = scmp.eq.s32.totalorder %s25, 1
      %p169 = por %p167, %p168
      %p170 = scmp.ne.s32.totalorder %s161, %s162
      %p171 = scmp.eq.s32.totalorder %s25, 0
      %p172 = por %p170, %p171
      %p173 = scmp.ne.s32.totalorder %s161, %s162
      %p174 = scmp.eq.s32.totalorder %s26, 1
      %p175 = por %p173, %p174
      %p177 = scmp.ne.s32.totalorder %s162, %s176
      %p178 = scmp.eq.s32.totalorder %s26, 0
      %p179 = por %p177, %p178
      %s181 = sadd.s32 %s180, 1
      %p184 = scmp.eq.s32.totalorder %s20, 1
      %p185 = scmp.ne.s32.totalorder %s180, %s182
      %p186 = scmp.eq.s32.totalorder %s20, 0
      %p187 = por %p185, %p186
      %p188 = scmp.ne.s32.totalorder %s180, %s182
      %p189 = scmp.eq.s32.totalorder %s25, 1
      %p190 = por %p188, %p189
      %p191 = scmp.ne.s32.totalorder %s182, %s183
      %p192 = scmp.eq.s32.totalorder %s25, 0
      %p193 = por %p191, %p192
      %p194 = scmp.ne.s32.totalorder %s182, %s183
      %p195 = scmp.eq.s32.totalorder %s26, 1
      %p196 = por %p194, %p195
      %p198 = scmp.ne.s32.totalorder %s183, %s197
      %p199 = scmp.eq.s32.totalorder %s26, 0
      %p200 = por %p198, %p199
      %s202 = sadd.s32 %s201, 1
      %p205 = scmp.eq.s32.totalorder %s20, 1
      %p206 = scmp.ne.s32.totalorder %s201, %s203
      %p207 = scmp.eq.s32.totalorder %s20, 0
      %p208 = por %p206, %p207
      %p209 = scmp.ne.s32.totalorder %s201, %s203
      %p210 = scmp.eq.s32.totalorder %s25, 1
      %p211 = por %p209, %p210
      %p212 = scmp.ne.s32.totalorder %s203, %s204
      %p213 = scmp.eq.s32.totalorder %s25, 0
      %p214 = por %p212, %p213
      %p215 = scmp.ne.s32.totalorder %s203, %s204
      %p216 = scmp.eq.s32.totalorder %s26, 1
      %p217 = por %p215, %p216
      %p219 = scmp.ne.s32.totalorder %s204, %s218
      %p220 = scmp.eq.s32.totalorder %s26, 0
      %p221 = por %p219, %p220
      %s222 = ssub.s32 %s20, %s27
      %p223 = scmp.eq.s32.totalorder %s222, 0
      %s225 = sadd.s32 %s224, 1
      %s226 = scalar_select %p223, %s224, %s225
      %p229 = pneg %p223
      %p230 = scmp.eq.s32.totalorder %s20, 1
      %p231 = por %p229, %p230
      %p232 = scmp.ne.s32.totalorder %s224, %s227
      %p233 = scmp.eq.s32.totalorder %s20, 0
      %p234 = por %p232, %p233
      %p235 = scmp.ne.s32.totalorder %s224, %s227
      %p236 = scmp.eq.s32.totalorder %s25, 1
      %p237 = por %p235, %p236
      %p238 = scmp.ne.s32.totalorder %s227, %s228
      %p239 = scmp.eq.s32.totalorder %s25, 0
      %p240 = por %p238, %p239
      %p241 = scmp.ne.s32.totalorder %s227, %s228
      %p242 = scmp.eq.s32.totalorder %s26, 1
      %p243 = por %p241, %p242
      %p245 = scmp.ne.s32.totalorder %s228, %s244
      %p246 = scmp.eq.s32.totalorder %s26, 0
      %p247 = por %p245, %p246
      %p248 = scmp.le.s32.totalorder 1, %s20
      %p249 = scmp.lt.s32.totalorder %s20, 3
      %p250 = pnand %p248, %p249
      %p251 = pneg %p250
      // Predicated region
      $region9: #{tpu_custom_call.1} parent=5 // pred_check
        _
      $region10: #{tpu_custom_call.1} parent=5 // pred_check_branch
        %253 = sbr.rel (%p250) target = $region12
      $region11: #{tpu_custom_call.1} parent=5 // pred_region
        %s254 = ssub.s32 %s20, 1
        // Predicated region
        $region13: #{tpu_custom_call.1} parent=11 // pred_check
          %p255 = pneg %p67
        $region14: #{tpu_custom_call.1} parent=11 // pred_check_branch
          %257 = sbr.rel (%p255) target = $region16
        $region15: #{tpu_custom_call.1} parent=11 // pred_region
          %259 = vsyncadd [#allocation3], 0
          %s261 = sshll.u32 %s1, 4
          %s262 = int_to_ptr.hbm [resolvable:$true] %s261
          %s263 = sshll.u32 [#allocation2], 4
          %s264 = int_to_ptr.vmem [resolvable:$true] %s263
          %266 = dma.hbm_to_vmem [thread:$0]  %s262, 16, %s264, [#allocation3]
        $region16: #{tpu_custom_call.1} parent=11 // pred_fallthru
          _
        // Predicated region
        $region17: #{tpu_custom_call.1} parent=11 // pred_check
          %p267 = pneg %p88
        $region18: #{tpu_custom_call.1} parent=11 // pred_check_branch
          %269 = sbr.rel (%p267) target = $region20
        $region19: #{tpu_custom_call.1} parent=11 // pred_region
          _
        $region20: #{tpu_custom_call.1} parent=11 // pred_fallthru
          _
        // Predicated region
        $region21: #{tpu_custom_call.1} parent=11 // pred_check
          %p270 = pneg %p109
        $region22: #{tpu_custom_call.1} parent=11 // pred_check_branch
          %272 = sbr.rel (%p270) target = $region24
        $region23: #{tpu_custom_call.1} parent=11 // pred_region
          _
        $region24: #{tpu_custom_call.1} parent=11 // pred_fallthru
          _
        // Predicated region
        $region25: #{tpu_custom_call.1} parent=11 // pred_check
          %p273 = pneg %p130
        $region26: #{tpu_custom_call.1} parent=11 // pred_check_branch
          %275 = sbr.rel (%p273) target = $region28
        $region27: #{tpu_custom_call.1} parent=11 // pred_region
          _
        $region28: #{tpu_custom_call.1} parent=11 // pred_fallthru
          _
        // Predicated region
        $region29: #{tpu_custom_call.1} parent=11 // pred_check
          %p276 = pneg %p151
        $region30: #{tpu_custom_call.1} parent=11 // pred_check_branch
          %278 = sbr.rel (%p276) target = $region32
        $region31: #{tpu_custom_call.1} parent=11 // pred_region
          %280 = vsyncadd [#allocation6], 0
          %s281 = sshll.u32 %s5, 4
          %s282 = int_to_ptr.hbm [resolvable:$true] %s281
          %s283 = sshll.u32 [#allocation5], 4
          %s284 = int_to_ptr.vmem [resolvable:$true] %s283
          %289 = dma.hbm_to_vmem [thread:$0]  %s282, 256, %s284, [#allocation6], 64, 64, 4
        $region32: #{tpu_custom_call.1} parent=11 // pred_fallthru
          _
        // Predicated region
        $region33: #{tpu_custom_call.1} parent=11 // pred_check
          %p290 = pneg %p172
        $region34: #{tpu_custom_call.1} parent=11 // pred_check_branch
          %292 = sbr.rel (%p290) target = $region36
        $region35: #{tpu_custom_call.1} parent=11 // pred_region
          _
        $region36: #{tpu_custom_call.1} parent=11 // pred_fallthru
          _
        // Predicated region
        $region37: #{tpu_custom_call.1} parent=11 // pred_check
          %p293 = pneg %p193
        $region38: #{tpu_custom_call.1} parent=11 // pred_check_branch
          %295 = sbr.rel (%p293) target = $region40
        $region39: #{tpu_custom_call.1} parent=11 // pred_region
          _
        $region40: #{tpu_custom_call.1} parent=11 // pred_fallthru
          _
        // Predicated region
        $region41: #{tpu_custom_call.1} parent=11 // pred_check
          %p296 = pneg %p214
        $region42: #{tpu_custom_call.1} parent=11 // pred_check_branch
          %298 = sbr.rel (%p296) target = $region44
        $region43: #{tpu_custom_call.1} parent=11 // pred_region
          _
        $region44: #{tpu_custom_call.1} parent=11 // pred_fallthru
          _
      $region12: #{tpu_custom_call.1} parent=5 // pred_fallthru
        _
      %p299 = scmp.lt.s32.totalorder %s20, 2
      // Predicated region
      $region45: #{tpu_custom_call.1} parent=5 // pred_check
        %p300 = pneg %p299
      $region46: #{tpu_custom_call.1} parent=5 // pred_check_branch
        %302 = sbr.rel (%p300) target = $region48
      $region47: #{tpu_custom_call.1} parent=5 // pred_region
        // Predicated region
        $region49: #{tpu_custom_call.1} parent=47 // pred_check
          %p303 = pneg %p40
        $region50: #{tpu_custom_call.1} parent=47 // pred_check_branch
          %305 = sbr.rel (%p303) target = $region52
        $region51: #{tpu_custom_call.1} parent=47 // pred_region
          %p306 = scmp.lt.s32.totalorder %s20, 1
          %s307 = scalar_select %p306, %s20, 1
          %s308 = smul.addr %s307, 8
          %s309 = scalar_lea.vmem %s0, %s308
        $region52: #{tpu_custom_call.1} parent=47 // pred_fallthru
          _
      $region48: #{tpu_custom_call.1} parent=5 // pred_fallthru
        _
      %p310 = scmp.le.s32.totalorder 1, %s20
      %p311 = scmp.lt.s32.totalorder %s20, 3
      %p312 = pnand %p310, %p311
      %p313 = pneg %p312
      // Predicated region
      $region53: #{tpu_custom_call.1} parent=5 // pred_check
        _
      $region54: #{tpu_custom_call.1} parent=5 // pred_check_branch
        %315 = sbr.rel (%p312) target = $region56
      $region55: #{tpu_custom_call.1} parent=5 // pred_region
        %s316 = ssub.s32 %s20, 1
        // Predicated region
        $region57: #{tpu_custom_call.1} parent=55 // pred_check
          %p317 = pneg %p67
        $region58: #{tpu_custom_call.1} parent=55 // pred_check_branch
          %319 = sbr.rel (%p317) target = $region60
        $region59: #{tpu_custom_call.1} parent=55 // pred_region
          %321 = dma.done [#allocation3], 16
        $region60: #{tpu_custom_call.1} parent=55 // pred_fallthru
          _
        // Predicated region
        $region61: #{tpu_custom_call.1} parent=55 // pred_check
          %p322 = pneg %p151
        $region62: #{tpu_custom_call.1} parent=55 // pred_check_branch
          %324 = sbr.rel (%p322) target = $region64
        $region63: #{tpu_custom_call.1} parent=55 // pred_region
          %326 = dma.done [#allocation6], 256
        $region64: #{tpu_custom_call.1} parent=55 // pred_fallthru
          _
        %p327 = scmp.lt.s32.totalorder %s25, 1
        %s328 = scalar_select %p327, %s25, 1
        %s329 = smul.addr %s328, 8
        %s330 = scalar_lea.vmem %s0, %s329
        %p331 = pneg %p46
        %p332 = pneg %p43
        %p333 = pneg %p67
        %p334 = pneg %p64
        %p335 = pneg %p88
        %p336 = pneg %p85
        %p337 = pneg %p109
        %p338 = pneg %p106
        %p339 = pneg %p130
        %p340 = pneg %p127
        %p341 = pneg %p151
        %p342 = pneg %p148
        %p343 = pneg %p172
        %p344 = pneg %p169
        %p345 = pneg %p193
        %p346 = pneg %p190
        %p347 = pneg %p214
        %p348 = pneg %p211
        %p349 = pneg %p240
        %p350 = pneg %p237
        %s351 = sand.u32 %s227, 1
        %s352 = scalar_lea.sflag [#allocation4], %s351
        %s353 = sand.u32 %s227, 1
        %s354 = smul.addr %s353, 8
        %s355 = scalar_lea.vmem [#allocation7], %s354
        %p356 = scmp.lt.s32.totalorder %s25, 1
        %s357 = scalar_select %p356, %s25, 1
        %s358 = smul.addr %s357, 8
        %s359 = scalar_lea.vmem %s0, %s358
        %v361 = vld [vmem:[%s359] sm:$0xff]
        %v362 = vld [vmem:[#allocation2] sm:$0x1]
        %v363 = vld [vmem:[%s2] sm:$0x1]
        %vm364 = vcmask 261120
        %v365 = vsel %vm364, %v361, 0.0
        %366 = vadd.xlane.f32.xlu0 %v365
        %v367 = vpop.xlane.xlu0 %366
        %v368 = vrcp.pop 32.0
        %v369 = vmul.f32 32.0, %v368
        %v370 = vsub.f32 1.0, %v369
        %v371 = vmul.f32 %v368, %v370
        %v372 = vadd.f32 %v368, %v371
        %vm373 = vweird.f32 %v368
        %v374 = vsel %vm373, %v368, %v372
        %v375 = vmul.f32 %v367, %v374
        %v376 = vsub.f32 %v361, %v375
        %v377 = vmul.f32 %v376, %v376
        %v378 = vsel %vm364, %v377, 0.0
        %379 = vadd.xlane.f32.xlu0 %v378
        %v380 = vpop.xlane.xlu0 %379
        %v381 = vmul.f32 %v380, %v374
        %v382 = vadd.f32 %v381, 1e-06
        %v383 = vrsqrt.pop %v382
        %v384 = vmul.f32 %v383, %v382
        %v385 = vmul.f32 %v384, %v383
        %v386 = vmul.f32 0.5, %v385
        %v387 = vsub.f32 1.5, %v386
        %v388 = vmul.f32 %v383, %v387
        %vm389 = vweird.f32 %v382
        %vm390 = vweird.f32 %v383
        %vm391 = vmor %vm389, %vm390
        %v392 = vsel %vm391, %v383, %v388
        %v393 = vmul.f32 %v376, %v392
        %v395 = vperm.slane %v362, 0
        %v397 = vmul.f32 %v393, %v395
        %v399 = vperm.slane %v363, 0
        %v401 = vadd.f32 %v397, %v399
        %v402 = vpack.c.bf16 %v401, %v401
        %v403 = vld [vmem:[%s3] sm:$0xf]
        %v404 = vld [vmem:[%s3 + $0x4] sm:$0xf]
        %v405 = vld [vmem:[%s3 + $0x8] sm:$0xf]
        %v406 = vld [vmem:[%s3 + $0xc] sm:$0xf]
        %v411 = vunpack.c.l.b16 %v403
        %v412 = vunpack.c.l.b16 %v404
        %v413 = vunpack.c.l.b16 %v405
        %v414 = vunpack.c.l.b16 %v406
        %v415 = vpack.c.b16 %v412, %v411
        %v416 = vpack.c.b16 %v414, %v413
        %v420 = vsel %vm364, %v402, 0
        %422 = vmatpush.bf16.msra.mxu0 0
        %423 = vmatpush.bf16.msra.mxu0 0
        %424 = vmatpush.bf16.msra.mxu0 0
        %425 = vmatpush.bf16.msra.mxu0 0
        %426 = vmatpush.bf16.msra.mxu0 0
        %427 = vmatpush.bf16.msra.mxu0 0
        %428 = vmatpush.bf16.msra.mxu0 %v416
        %429 = vmatpush.bf16.msra.mxu0 %v415
        %430 = vmatmul.bf16.gmra.mxu0 %v420
        %v431 = vpop.f32.mrf.mxu0
        %v432 = vadd.f32 0.0, %v431
        %v433 = vpop.f32.mrf.mxu0
        %434 = vdwg.mxu0
        %v435 = vpack.c.bf16 %v432, %v432
        %437 = vrot.lane.b32.xlu0 %v435, 120
        %v438 = vpop.permute.xlu0 %437
        %439 = vrot.lane.b32.xlu0 %v435, 112
        %v440 = vpop.permute.xlu0 %439
        %441 = vrot.lane.b32.xlu0 %v435, 104
        %v442 = vpop.permute.xlu0 %441
        %v443 = vunpack.c.l.b16 %v435
        %v444 = vpack.c.b16 %v443, %v443
        %445 = vrot.lane.b32.xlu0 %v444, 96
        %v446 = vpop.permute.xlu0 %445
        %vm447 = vcmask 64512
        %v449 = vsel %vm447, %v435, 0
        %v452 = vsel %vm447, %v446, 0
        %454 = vmatpush.bf16.xpose.msra.mxu0 0
        %455 = vmatpush.bf16.xpose.msra.mxu0 0
        %456 = vmatpush.bf16.xpose.msra.mxu0 0
        %457 = vmatpush.bf16.xpose.msra.mxu0 0
        %458 = vmatpush.bf16.xpose.msra.mxu0 0
        %459 = vmatpush.bf16.xpose.msra.mxu0 0
        %460 = vmatpush.bf16.xpose.msra.mxu0 0
        %461 = vmatpush.bf16.xpose.msra.mxu0 %v452
        %462 = vmatmul.bf16.gmra.mxu0 %v449
        %v463 = vpop.f32.mrf.mxu0
        %v464 = vadd.f32 0.0, %v463
        %v465 = vpop.f32.mrf.mxu0
        %466 = vdwg.mxu0
        %v467 = vunpack.c.l.b16 %v438
        %v468 = vpack.c.b16 %v467, %v467
        %469 = vrot.lane.b32.xlu0 %v468, 96
        %v470 = vpop.permute.xlu0 %469
        %v472 = vsel %vm447, %v438, 0
        %v475 = vsel %vm447, %v470, 0
        %477 = vmatpush.bf16.xpose.msra.mxu0 0
        %478 = vmatpush.bf16.xpose.msra.mxu0 0
        %479 = vmatpush.bf16.xpose.msra.mxu0 0
        %480 = vmatpush.bf16.xpose.msra.mxu0 0
        %481 = vmatpush.bf16.xpose.msra.mxu0 0
        %482 = vmatpush.bf16.xpose.msra.mxu0 0
        %483 = vmatpush.bf16.xpose.msra.mxu0 0
        %484 = vmatpush.bf16.xpose.msra.mxu0 %v475
        %485 = vmatmul.bf16.gmra.mxu0 %v472
        %v486 = vpop.f32.mrf.mxu0
        %v487 = vadd.f32 0.0, %v486
        %v488 = vpop.f32.mrf.mxu0
        %489 = vdwg.mxu0
        %v490 = vunpack.c.l.b16 %v440
        %v491 = vpack.c.b16 %v490, %v490
        %492 = vrot.lane.b32.xlu0 %v491, 96
        %v493 = vpop.permute.xlu0 %492
        %v495 = vsel %vm447, %v440, 0
        %v498 = vsel %vm447, %v493, 0
        %500 = vmatpush.bf16.xpose.msra.mxu0 0
        %501 = vmatpush.bf16.xpose.msra.mxu0 0
        %502 = vmatpush.bf16.xpose.msra.mxu0 0
        %503 = vmatpush.bf16.xpose.msra.mxu0 0
        %504 = vmatpush.bf16.xpose.msra.mxu0 0
        %505 = vmatpush.bf16.xpose.msra.mxu0 0
        %506 = vmatpush.bf16.xpose.msra.mxu0 0
        %507 = vmatpush.bf16.xpose.msra.mxu0 %v498
        %508 = vmatmul.bf16.gmra.mxu0 %v495
        %v509 = vpop.f32.mrf.mxu0
        %v510 = vadd.f32 0.0, %v509
        %v511 = vpop.f32.mrf.mxu0
        %512 = vdwg.mxu0
        %v513 = vunpack.c.l.b16 %v442
        %v514 = vpack.c.b16 %v513, %v513
        %515 = vrot.lane.b32.xlu0 %v514, 96
        %v516 = vpop.permute.xlu0 %515
        %v518 = vsel %vm447, %v442, 0
        %v521 = vsel %vm447, %v516, 0
        %523 = vmatpush.bf16.xpose.msra.mxu0 0
        %524 = vmatpush.bf16.xpose.msra.mxu0 0
        %525 = vmatpush.bf16.xpose.msra.mxu0 0
        %526 = vmatpush.bf16.xpose.msra.mxu0 0
        %527 = vmatpush.bf16.xpose.msra.mxu0 0
        %528 = vmatpush.bf16.xpose.msra.mxu0 0
        %529 = vmatpush.bf16.xpose.msra.mxu0 0
        %530 = vmatpush.bf16.xpose.msra.mxu0 %v521
        %531 = vmatmul.bf16.gmra.mxu0 %v518
        %v532 = vpop.f32.mrf.mxu0
        %v533 = vadd.f32 0.0, %v532
        %v534 = vpop.f32.mrf.mxu0
        %535 = vdwg.mxu0
        %v536 = vsel %vm447, %v464, -inf
        %537 = vmax.xlane.f32.xlu0 %v536
        %v538 = vpop.xlane.xlu0 %537
        %v539 = vsel %vm447, %v487, -inf
        %540 = vmax.xlane.f32.xlu0 %v539
        %v541 = vpop.xlane.xlu0 %540
        %v542 = vsel %vm447, %v510, -inf
        %543 = vmax.xlane.f32.xlu0 %v542
        %v544 = vpop.xlane.xlu0 %543
        %v545 = vsel %vm447, %v533, -inf
        %546 = vmax.xlane.f32.xlu0 %v545
        %v547 = vpop.xlane.xlu0 %546
        %v548 = vsub.f32 %v464, %v538
        %v549 = vsub.f32 %v487, %v541
        %v550 = vsub.f32 %v510, %v544
        %v551 = vsub.f32 %v533, %v547
        %v552 = vmul.f32 %v548, 1.442695
        %v553 = vpow.pop %v552
        %v554 = vmul.f32 %v549, 1.442695
        %v555 = vpow.pop %v554
        %v556 = vmul.f32 %v550, 1.442695
        %v557 = vpow.pop %v556
        %v558 = vmul.f32 %v551, 1.442695
        %v559 = vpow.pop %v558
        %v560 = vsel %vm447, %v553, 0.0
        %561 = vadd.xlane.f32.xlu0 %v560
        %v562 = vpop.xlane.xlu0 %561
        %v563 = vsel %vm447, %v555, 0.0
        %564 = vadd.xlane.f32.xlu0 %v563
        %v565 = vpop.xlane.xlu0 %564
        %v566 = vsel %vm447, %v557, 0.0
        %567 = vadd.xlane.f32.xlu0 %v566
        %v568 = vpop.xlane.xlu0 %567
        %v569 = vsel %vm447, %v559, 0.0
        %570 = vadd.xlane.f32.xlu0 %v569
        %v571 = vpop.xlane.xlu0 %570
        %v572 = vrcp.pop %v562
        %v573 = vrcp.pop %v565
        %v574 = vrcp.pop %v568
        %v575 = vrcp.pop %v571
        %v576 = vmul.f32 %v553, %v572
        %v577 = vmul.f32 %v555, %v573
        %v578 = vmul.f32 %v557, %v574
        %v579 = vmul.f32 %v559, %v575
        %v580 = vpack.c.bf16 %v576, %v576
        %v581 = vpack.c.bf16 %v577, %v577
        %v582 = vpack.c.bf16 %v578, %v578
        %v583 = vpack.c.bf16 %v579, %v579
        %584 = vrot.lane.b32.xlu0 %v444, 64
        %v585 = vpop.permute.xlu0 %584
        %v587 = vsel %vm447, %v580, 0
        %vm589 = vcmask 1043456
        %v591 = vsel %vm589, %v585, 0
        %593 = vmatpush.bf16.msra.mxu0 0
        %594 = vmatpush.bf16.msra.mxu0 0
        %595 = vmatpush.bf16.msra.mxu0 0
        %596 = vmatpush.bf16.msra.mxu0 0
        %597 = vmatpush.bf16.msra.mxu0 0
        %598 = vmatpush.bf16.msra.mxu0 0
        %599 = vmatpush.bf16.msra.mxu0 0
        %600 = vmatpush.bf16.msra.mxu0 %v591
        %601 = vmatmul.bf16.gmra.mxu0 %v587
        %v602 = vpop.f32.mrf.mxu0
        %v603 = vadd.f32 0.0, %v602
        %v604 = vpop.f32.mrf.mxu0
        %605 = vdwg.mxu0
        %606 = vrot.lane.b32.xlu0 %v468, 64
        %v607 = vpop.permute.xlu0 %606
        %v609 = vsel %vm447, %v581, 0
        %v612 = vsel %vm589, %v607, 0
        %614 = vmatpush.bf16.msra.mxu0 0
        %615 = vmatpush.bf16.msra.mxu0 0
        %616 = vmatpush.bf16.msra.mxu0 0
        %617 = vmatpush.bf16.msra.mxu0 0
        %618 = vmatpush.bf16.msra.mxu0 0
        %619 = vmatpush.bf16.msra.mxu0 0
        %620 = vmatpush.bf16.msra.mxu0 0
        %621 = vmatpush.bf16.msra.mxu0 %v612
        %622 = vmatmul.bf16.gmra.mxu0 %v609
        %v623 = vpop.f32.mrf.mxu0
        %v624 = vadd.f32 0.0, %v623
        %v625 = vpop.f32.mrf.mxu0
        %626 = vdwg.mxu0
        %627 = vrot.lane.b32.xlu0 %v491, 64
        %v628 = vpop.permute.xlu0 %627
        %v630 = vsel %vm447, %v582, 0
        %v633 = vsel %vm589, %v628, 0
        %635 = vmatpush.bf16.msra.mxu0 0
        %636 = vmatpush.bf16.msra.mxu0 0
        %637 = vmatpush.bf16.msra.mxu0 0
        %638 = vmatpush.bf16.msra.mxu0 0
        %639 = vmatpush.bf16.msra.mxu0 0
        %640 = vmatpush.bf16.msra.mxu0 0
        %641 = vmatpush.bf16.msra.mxu0 0
        %642 = vmatpush.bf16.msra.mxu0 %v633
        %643 = vmatmul.bf16.gmra.mxu0 %v630
        %v644 = vpop.f32.mrf.mxu0
        %v645 = vadd.f32 0.0, %v644
        %v646 = vpop.f32.mrf.mxu0
        %647 = vdwg.mxu0
        %648 = vrot.lane.b32.xlu0 %v514, 64
        %v649 = vpop.permute.xlu0 %648
        %v651 = vsel %vm447, %v583, 0
        %v654 = vsel %vm589, %v649, 0
        %656 = vmatpush.bf16.msra.mxu0 0
        %657 = vmatpush.bf16.msra.mxu0 0
        %658 = vmatpush.bf16.msra.mxu0 0
        %659 = vmatpush.bf16.msra.mxu0 0
        %660 = vmatpush.bf16.msra.mxu0 0
        %661 = vmatpush.bf16.msra.mxu0 0
        %662 = vmatpush.bf16.msra.mxu0 0
        %663 = vmatpush.bf16.msra.mxu0 %v654
        %664 = vmatmul.bf16.gmra.mxu0 %v651
        %v665 = vpop.f32.mrf.mxu0
        %v666 = vadd.f32 0.0, %v665
        %v667 = vpop.f32.mrf.mxu0
        %668 = vdwg.mxu0
        %670 = vrot.lane.b32.xlu0 %v624, 8
        %v671 = vpop.permute.xlu0 %670
        %674 = vrot.lane.b32.xlu0 %v645, 16
        %v675 = vpop.permute.xlu0 %674
        %678 = vrot.lane.b32.xlu0 %v666, 24
        %v679 = vpop.permute.xlu0 %678
        %v681 = vsel %vm447, %v603, %v671
        %vm682 = vcmask 130048
        %v683 = vsel %vm682, %v681, %v675
        %vm684 = vcmask 195584
        %v685 = vsel %vm684, %v683, %v679
        %v686 = vpack.c.bf16 %v685, %v685
        %v687 = vld [vmem:[%s4] sm:$0xf]
        %v688 = vld [vmem:[%s4 + $0x4] sm:$0xf]
        %v689 = vld [vmem:[%s4 + $0x8] sm:$0xf]
        %v690 = vld [vmem:[%s4 + $0xc] sm:$0xf]
        %v695 = vunpack.c.l.b16 %v687
        %v696 = vunpack.c.l.b16 %v688
        %v697 = vunpack.c.l.b16 %v689
        %v698 = vunpack.c.l.b16 %v690
        %v699 = vpack.c.b16 %v696, %v695
        %v700 = vpack.c.b16 %v698, %v697
        %v704 = vsel %vm364, %v686, 0
        %706 = vmatpush.bf16.msra.mxu0 0
        %707 = vmatpush.bf16.msra.mxu0 0
        %708 = vmatpush.bf16.msra.mxu0 0
        %709 = vmatpush.bf16.msra.mxu0 0
        %710 = vmatpush.bf16.msra.mxu0 0
        %711 = vmatpush.bf16.msra.mxu0 0
        %712 = vmatpush.bf16.msra.mxu0 %v700
        %713 = vmatpush.bf16.msra.mxu0 %v699
        %714 = vmatmul.bf16.gmra.mxu0 %v704
        %v715 = vpop.f32.mrf.mxu0
        %v716 = vadd.f32 %v361, %v715
        %v717 = vpop.f32.mrf.mxu0
        %718 = vdwg.mxu0
        %v719 = vsel %vm364, %v716, 0.0
        %720 = vadd.xlane.f32.xlu0 %v719
        %v721 = vpop.xlane.xlu0 %720
        %v722 = vmul.f32 %v721, %v374
        %v723 = vsub.f32 %v716, %v722
        %v724 = vmul.f32 %v723, %v723
        %v725 = vsel %vm364, %v724, 0.0
        %726 = vadd.xlane.f32.xlu0 %v725
        %v727 = vpop.xlane.xlu0 %726
        %v728 = vmul.f32 %v727, %v374
        %v729 = vadd.f32 %v728, 1e-06
        %v730 = vrsqrt.pop %v729
        %v731 = vmul.f32 %v730, %v729
        %v732 = vmul.f32 %v731, %v730
        %v733 = vmul.f32 0.5, %v732
        %v734 = vsub.f32 1.5, %v733
        %v735 = vmul.f32 %v730, %v734
        %vm736 = vweird.f32 %v729
        %vm737 = vweird.f32 %v730
        %vm738 = vmor %vm736, %vm737
        %v739 = vsel %vm738, %v730, %v735
        %v740 = vmul.f32 %v723, %v739
        %v741 = vpack.c.bf16 %v740, %v740
        %v742 = vld [vmem:[#allocation5] sm:$0xf]
        %v743 = vld [vmem:[#allocation5 + $0x4] sm:$0xf]
        %v744 = vld [vmem:[#allocation5 + $0x8] sm:$0xf]
        %v745 = vld [vmem:[#allocation5 + $0xc] sm:$0xf]
        %v746 = vld [vmem:[%s6] sm:$0x1]
        %v748 = vperm.slane %v746, 0
        %v754 = vunpack.c.l.b16 %v742
        %v755 = vunpack.c.l.b16 %v743
        %v756 = vunpack.c.l.b16 %v744
        %v757 = vunpack.c.l.b16 %v745
        %v758 = vpack.c.b16 %v755, %v754
        %v759 = vpack.c.b16 %v757, %v756
        %v763 = vsel %vm364, %v741, 0
        %765 = vmatpush.bf16.msra.mxu0 0
        %766 = vmatpush.bf16.msra.mxu0 0
        %767 = vmatpush.bf16.msra.mxu0 0
        %768 = vmatpush.bf16.msra.mxu0 0
        %769 = vmatpush.bf16.msra.mxu0 0
        %770 = vmatpush.bf16.msra.mxu0 0
        %771 = vmatpush.bf16.msra.mxu0 %v759
        %772 = vmatpush.bf16.msra.mxu0 %v758
        %773 = vmatmul.bf16.gmra.mxu0 %v763
        %v774 = vpop.f32.mrf.mxu0
        %v775 = vadd.f32 %v748, %v774
        %v776 = vpop.f32.mrf.mxu0
        %777 = vdwg.mxu0
        %v778 = vmul.f32 %v775, 0.5
        %v779 = vmul.f32 %v775, 0.70710677
        %v780 = vand.u32 2147483647, %v779
        %v781 = vmul.f32 %v780, 0.3275911
        %v782 = vadd.f32 %v781, 1.0
        %v783 = vrcp.pop %v782
        %v784 = vmul.f32 %v782, %v783
        %v785 = vsub.f32 1.0, %v784
        %v786 = vmul.f32 %v783, %v785
        %v787 = vadd.f32 %v783, %v786
        %vm788 = vweird.f32 %v782
        %vm789 = vweird.f32 %v783
        %vm790 = vmor %vm788, %vm789
        %v791 = vsel %vm790, %v783, %v787
        %v792 = vand.u32 2147483647, %v782
        %vm793 = vcmp.eq.f32.partialorder %v792, 8.507059e+37
        %v794 = vand.u32 %v782, 2147483648
        %v795 = vor.u32 1.1754944e-38, %v794
        %v796 = vsel %vm793, %v795, %v791
        %v797 = vmul.f32 1.0, %v796
        %v798 = vmul.f32 %v797, 1.0614054
        %v799 = vadd.f32 %v798, -1.4531521
        %v800 = vmul.f32 %v799, %v797
        %v801 = vadd.f32 %v800, 1.4214138
        %v802 = vmul.f32 %v801, %v797
        %v803 = vadd.f32 %v802, -0.28449672
        %v804 = vmul.f32 %v803, %v797
        %v805 = vadd.f32 %v804, 0.2548296
        %v806 = vmul.f32 %v805, %v797
        %v807 = vsub.f32 0.0, %v780
        %v808 = vmul.f32 %v807, %v780
        %v809 = vmul.f32 %v808, 1.442695
        %v810 = vpow.pop %v809
        %v811 = vmul.f32 %v806, %v810
        %v812 = vsub.f32 1.0, %v811
        %vm813 = vcmp.ge.f32.partialorder %v779, 0.0
        %v814 = vsub.f32 0.0, %v812
        %v815 = vsel %vm813, %v812, %v814
        %v816 = vadd.f32 %v815, 1.0
        %v817 = vmul.f32 %v778, %v816
        %v818 = vpack.c.bf16 %v817, %v817
        %v819 = vld [vmem:[%s7] sm:$0xf]
        %v820 = vld [vmem:[%s7 + $0x4] sm:$0xf]
        %v821 = vld [vmem:[%s7 + $0x8] sm:$0xf]
        %v822 = vld [vmem:[%s7 + $0xc] sm:$0xf]
        %v823 = vld [vmem:[%s7 + $0x10] sm:$0xf]
        %v824 = vld [vmem:[%s7 + $0x14] sm:$0xf]
        %v825 = vld [vmem:[%s7 + $0x18] sm:$0xf]
        %v826 = vld [vmem:[%s7 + $0x1c] sm:$0xf]
        %v827 = vld [vmem:[%s8] sm:$0x1]
        %v829 = vperm.slane %v827, 0
        %v839 = vunpack.c.l.b16 %v819
        %v840 = vunpack.c.l.b16 %v820
        %v841 = vunpack.c.l.b16 %v821
        %v842 = vunpack.c.l.b16 %v822
        %v843 = vunpack.c.l.b16 %v823
        %v844 = vunpack.c.l.b16 %v824
        %v845 = vunpack.c.l.b16 %v825
        %v846 = vunpack.c.l.b16 %v826
        %v847 = vpack.c.b16 %v840, %v839
        %v848 = vpack.c.b16 %v842, %v841
        %v849 = vpack.c.b16 %v844, %v843
        %v850 = vpack.c.b16 %v846, %v845
        %vm855 = vcmask 523264
        %v857 = vsel %vm855, %v818, 0
        %859 = vmatpush.bf16.msra.mxu0 0
        %860 = vmatpush.bf16.msra.mxu0 0
        %861 = vmatpush.bf16.msra.mxu0 0
        %862 = vmatpush.bf16.msra.mxu0 0
        %863 = vmatpush.bf16.msra.mxu0 %v850
        %864 = vmatpush.bf16.msra.mxu0 %v849
        %865 = vmatpush.bf16.msra.mxu0 %v848
        %866 = vmatpush.bf16.msra.mxu0 %v847
        %867 = vmatmul.bf16.gmra.mxu0 %v857
        %v868 = vpop.f32.mrf.mxu0
        %v869 = vadd.f32 %v829, %v868
        %v870 = vpop.f32.mrf.mxu0
        %871 = vdwg.mxu0
        %v872 = vadd.f32 %v869, %v716
        %873 = vst.msk [vmem:[%s355] sm:$0xff] %vm364, %v872
        %s874 = sand.u32 %s227, 1
        %s875 = scalar_lea.sflag [#allocation4], %s874
        %s876 = sand.u32 %s227, 1
        %s877 = smul.addr %s876, 8
        %s878 = scalar_lea.vmem [#allocation7], %s877
        // Predicated region
        $region65: #{tpu_custom_call.1} parent=55 // pred_check
          %p879 = pneg %p237
        $region66: #{tpu_custom_call.1} parent=55 // pred_check_branch
          %881 = sbr.rel (%p879) target = $region68
        $region67: #{tpu_custom_call.1} parent=55 // pred_region
          %883 = vsyncadd %s875, 0
          %s884 = smul.addr %s25, 8
          %s885 = scalar_lea.hbm %s9, %s884
          %s887 = sshll.u32 %s878, 4
          %s888 = int_to_ptr.vmem [resolvable:$true] %s887
          %s889 = sshll.u32 %s885, 4
          %s890 = int_to_ptr.hbm [resolvable:$true] %s889
          %892 = dma.vmem_to_hbm [thread:$0]  %s888, 128, %s890, %s875
        $region68: #{tpu_custom_call.1} parent=55 // pred_fallthru
          _
      $region56: #{tpu_custom_call.1} parent=5 // pred_fallthru
        _
      %p893 = scmp.le.s32.totalorder 2, %s20
      // Predicated region
      $region69: #{tpu_custom_call.1} parent=5 // pred_check
        %p894 = pneg %p893
      $region70: #{tpu_custom_call.1} parent=5 // pred_check_branch
        %896 = sbr.rel (%p894) target = $region72
      $region71: #{tpu_custom_call.1} parent=5 // pred_region
        %s897 = ssub.s32 %s20, 2
        // Predicated region
        $region73: #{tpu_custom_call.1} parent=71 // pred_check
          %p898 = pneg %p243
        $region74: #{tpu_custom_call.1} parent=71 // pred_check_branch
          %900 = sbr.rel (%p898) target = $region76
        $region75: #{tpu_custom_call.1} parent=71 // pred_region
          %s901 = sand.u32 %s228, 1
          %s902 = scalar_lea.sflag [#allocation4], %s901
          %s903 = sand.u32 %s228, 1
          %s904 = smul.addr %s903, 8
          %s905 = scalar_lea.vmem [#allocation7], %s904
          %907 = dma.done %s902, 128
        $region76: #{tpu_custom_call.1} parent=71 // pred_fallthru
          _
      $region72: #{tpu_custom_call.1} parent=5 // pred_fallthru
        _
    $region6: #{tpu_custom_call.1} parent=1 // loop_footer
      %s24 = sadd.s32 1, %s20
    $region7: #{tpu_custom_call.1} parent=1 // loop_footer_branch
      %19 = sbr.rel target = $region3
    $region8: #{tpu_custom_call.1} parent=1 // loop_exit
      _
    %908 = vsyncpa [#allocation3], 1
    %s909 = scalar_lea.sflag [#allocation3], 1
    %910 = vsyncpa %s909, 1
    %911 = vsyncpa [#allocation6], 1
    %912 = vsyncpa [#allocation4], 1
    %s913 = scalar_lea.sflag [#allocation4], 1
    %914 = vsyncpa %s913, 1

</llo_original>
